<compile_context>
chip_gen: v5e
topology: v5e:2x2
jax: 0.10.0
libtpu: 0.0.40
codegen_flags: <defaults>
</compile_context>

<pallas_src>
import functools
import math

import jax
import jax.numpy as jnp
from jax import lax
from jax.experimental import pallas as pl
from jax.experimental.pallas import tpu as pltpu


def _msa_kernel(x_ref, w_ref, b_ref, o_ref, *, n_heads, d_head):
    # x_ref block: (1, S, d);  w_ref: (d, 3d);  b_ref: (1, 3d);  o_ref: (1, S, d)
    x = x_ref[0]                         # (S, d)
    w = w_ref[...]                       # (d, 3d) block-diagonal, pre-transposed
    b = b_ref[...]                       # (1, 3d)

    # One fused MXU matmul (K = d) produces q/k/v for all heads at once.
    qkv = jnp.dot(x, w, preferred_element_type=jnp.float32) + b   # (S, 3d)

    d = n_heads * d_head
    q = qkv[:, :d]
    k = qkv[:, d:2 * d]
    v = qkv[:, 2 * d:]

    scale = 1.0 / math.sqrt(d_head)
    contract_last = (((1,), (1,)), ((), ()))   # q @ k^T without materializing k.T

    outs = []
    for h in range(n_heads):             # static, unrolled at trace time
        lo = h * d_head
        hi = lo + d_head
        qh = q[:, lo:hi]                 # (S, dh)
        kh = k[:, lo:hi]
        vh = v[:, lo:hi]

        s = lax.dot_general(qh, kh, contract_last,
                            preferred_element_type=jnp.float32) * scale  # (S, S)

        # numerically-stable softmax along the last dim (matches torch Softmax)
        m = jnp.max(s, axis=-1, keepdims=True)
        p = jnp.exp(s - m)
        # exact reciprocal so the result holds a 1e-5 comparison vs. reference
        attn = p * pl.reciprocal(jnp.sum(p, axis=-1, keepdims=True), approx=False)

        outs.append(jnp.dot(attn, vh, preferred_element_type=jnp.float32))

    # lane-dense (S, d) slab store (torch.hstack of per-head results)
    o_ref[0] = jnp.concatenate(outs, axis=-1).astype(o_ref.dtype)


def msa_forward(x, wq, bq, wk, bk, wv, bv, n_heads):
    """x: (B, S, d) float32.  w*: (H, dh, dh) PyTorch Linear weights (out, in).
    b*: (H, dh).  Returns (B, S, d)."""
    B, S, d = x.shape
    assert d % n_heads == 0
    dh = d // n_heads

    # Wrapper-side weight prep (cheap, one-time):
    #   nn.Linear is y = x @ W.T + b, so store W.T; placing each head's W.T on
    #   a block diagonal lets the kernel multiply the full (S, d) activation
    #   while head h only consumes its own channel slice. q/k/v are fused
    #   column-wise into a single (d, 3d) weight.
    def block_diag_t(w):
        return jax.scipy.linalg.block_diag(*[w[h].T for h in range(n_heads)])

    w_fused = jnp.concatenate(
        [block_diag_t(wq), block_diag_t(wk), block_diag_t(wv)], axis=1)  # (d, 3d)
    b_fused = jnp.concatenate(
        [bq.reshape(-1), bk.reshape(-1), bv.reshape(-1)]).reshape(1, 3 * d)

    kernel = functools.partial(_msa_kernel, n_heads=n_heads, d_head=dh)

    return pl.pallas_call(
        kernel,
        out_shape=jax.ShapeDtypeStruct((B, S, d), x.dtype),
        grid_spec=pltpu.PrefetchScalarGridSpec(
            num_scalar_prefetch=0,
            grid=(B,),
            in_specs=[
                pl.BlockSpec((1, S, d), lambda i: (i, 0, 0)),       # x
                pl.BlockSpec((d, 3 * d), lambda i: (0, 0)),         # fused W (same block every step)
                pl.BlockSpec((1, 3 * d), lambda i: (0, 0)),         # fused bias
            ],
            out_specs=pl.BlockSpec((1, S, d), lambda i: (i, 0, 0)),
        ),
        compiler_params=pltpu.CompilerParams(
            dimension_semantics=("parallel",)),
    )(x, w_fused, b_fused)


def _reference_msa(x, wq, bq, wk, bk, wv, bv, n_heads):
    """Pure-JAX reference reproducing the PyTorch loop semantics."""
    B, S, d = x.shape
    dh = d // n_heads
    outs = []
    for b in range(B):
        heads = []
        for h in range(n_heads):
            seq = x[b, :, h * dh:(h + 1) * dh]
            q = seq @ wq[h].T + bq[h]
            k = seq @ wk[h].T + bk[h]
            v = seq @ wv[h].T + bv[h]
            attn = jax.nn.softmax(q @ k.T / (dh ** 0.5), axis=-1)
            heads.append(attn @ v)
        outs.append(jnp.concatenate(heads, axis=-1))
    return jnp.stack(outs, axis=0)


if __name__ == "__main__":
    # small shapes consistent with the module: d=32, n_heads=4 -> d_head=8
    B, S, d, n_heads = 2, 8, 32, 4
    dh = d // n_heads

    key = jax.random.PRNGKey(0)
    kx, kq, kbq, kk, kbk, kv, kbv = jax.random.split(key, 7)

    x = jax.random.normal(kx, (B, S, d), dtype=jnp.float32)

    # deterministic nn.Linear-style init: U(-1/sqrt(in), 1/sqrt(in))
    bound = 1.0 / (dh ** 0.5)
    wq = jax.random.uniform(kq, (n_heads, dh, dh), jnp.float32, -bound, bound)
    bq = jax.random.uniform(kbq, (n_heads, dh), jnp.float32, -bound, bound)
    wk = jax.random.uniform(kk, (n_heads, dh, dh), jnp.float32, -bound, bound)
    bk = jax.random.uniform(kbk, (n_heads, dh), jnp.float32, -bound, bound)
    wv = jax.random.uniform(kv, (n_heads, dh, dh), jnp.float32, -bound, bound)
    bv = jax.random.uniform(kbv, (n_heads, dh), jnp.float32, -bound, bound)

    out = msa_forward(x, wq, bq, wk, bk, wv, bv, n_heads)
    out = jax.block_until_ready(out)

    ref = _reference_msa(x, wq, bq, wk, bk, wv, bv, n_heads)
    assert out.shape == (B, S, d)
    assert jnp.allclose(out, ref, atol=1e-5, rtol=1e-5)

    print("KERNEL_OK")
</pallas_src>

<mosaic_0001>
module attributes {stable_mosaic.version = 11 : i64} {
  func.func @_msa_kernel(%arg0: i32, %arg1: memref<1x8x32xf32, #tpu.memory_space<vmem>>, %arg2: memref<32x96xf32, #tpu.memory_space<vmem>>, %arg3: memref<1x96xf32, #tpu.memory_space<vmem>>, %arg4: memref<1x8x32xf32, #tpu.memory_space<vmem>>) attributes {dimension_semantics = [#tpu.dimension_semantics<parallel>], iteration_bounds = array<i64: 2>, scalar_prefetch = 0 : i64, scratch_operands = 0 : i64, tpu.core_type = #tpu.core_type<tc>, window_params = [{transform_indices = @transform_0, window_bounds = array<i64: 1, 8, 32>}, {pipeline_mode = #tpu.pipeline_mode<synchronous>, transform_indices = @transform_1, window_bounds = array<i64: 32, 96>}, {pipeline_mode = #tpu.pipeline_mode<synchronous>, transform_indices = @transform_2, window_bounds = array<i64: 1, 96>}, {transform_indices = @transform_3, window_bounds = array<i64: 1, 8, 32>}]} {
    %c0 = arith.constant 0 : index
    %c0_0 = arith.constant 0 : index
    %c0_1 = arith.constant 0 : index
    %0 = vector.load %arg1[%c0, %c0_0, %c0_1] : memref<1x8x32xf32, #tpu.memory_space<vmem>>, vector<1x8x32xf32>
    %1 = vector.shape_cast %0 : vector<1x8x32xf32> to vector<8x32xf32>
    %c0_2 = arith.constant 0 : index
    %c0_3 = arith.constant 0 : index
    %2 = vector.load %arg2[%c0_2, %c0_3] : memref<32x96xf32, #tpu.memory_space<vmem>>, vector<32x96xf32>
    %c0_4 = arith.constant 0 : index
    %c0_5 = arith.constant 0 : index
    %3 = vector.load %arg3[%c0_4, %c0_5] : memref<1x96xf32, #tpu.memory_space<vmem>>, vector<1x96xf32>
    %cst = arith.constant dense<0.000000e+00> : vector<8x96xf32>
    %4 = tpu.matmul %1, %2, %cst {dimension_numbers = #tpu.dot_dimension_numbers<[1], [0], [0], [1], [0, 0, 1, 1], [], []>} : vector<8x32xf32>, vector<32x96xf32>, vector<8x96xf32> -> vector<8x96xf32>
    %5 = vector.broadcast %3 : vector<1x96xf32> to vector<8x96xf32>
    %6 = arith.addf %4, %5 : vector<8x96xf32>
    %7 = vector.extract_strided_slice %6 {offsets = [0, 0], sizes = [8, 32], strides = [1, 1]} : vector<8x96xf32> to vector<8x32xf32>
    %8 = vector.extract_strided_slice %6 {offsets = [0, 32], sizes = [8, 32], strides = [1, 1]} : vector<8x96xf32> to vector<8x32xf32>
    %9 = vector.extract_strided_slice %6 {offsets = [0, 64], sizes = [8, 32], strides = [1, 1]} : vector<8x96xf32> to vector<8x32xf32>
    %10 = vector.extract_strided_slice %7 {offsets = [0, 0], sizes = [8, 8], strides = [1, 1]} : vector<8x32xf32> to vector<8x8xf32>
    %11 = vector.extract_strided_slice %8 {offsets = [0, 0], sizes = [8, 8], strides = [1, 1]} : vector<8x32xf32> to vector<8x8xf32>
    %12 = vector.extract_strided_slice %9 {offsets = [0, 0], sizes = [8, 8], strides = [1, 1]} : vector<8x32xf32> to vector<8x8xf32>
    %cst_6 = arith.constant dense<0.000000e+00> : vector<8x8xf32>
    %13 = tpu.matmul %10, %11, %cst_6 {dimension_numbers = #tpu.dot_dimension_numbers<[1], [1], [0], [0], [0, 0, 1, 0], [], []>} : vector<8x8xf32>, vector<8x8xf32>, vector<8x8xf32> -> vector<8x8xf32>
    %cst_7 = arith.constant 0.353553385 : f32
    %14 = vector.broadcast %cst_7 : f32 to vector<8x8xf32>
    %15 = arith.mulf %13, %14 : vector<8x8xf32>
    %cst_8 = arith.constant dense<0xFF800000> : vector<8xf32>
    %16 = vector.multi_reduction <maximumf>, %15, %cst_8 [1] : vector<8x8xf32> to vector<8xf32>
    %17 = vector.shape_cast %16 : vector<8xf32> to vector<8x1xf32>
    %18 = vector.broadcast %17 : vector<8x1xf32> to vector<8x8xf32>
    %19 = arith.subf %15, %18 : vector<8x8xf32>
    %20 = math.exp %19 : vector<8x8xf32>
    %cst_9 = arith.constant dense<0.000000e+00> : vector<8xf32>
    %21 = vector.multi_reduction <add>, %20, %cst_9 [1] : vector<8x8xf32> to vector<8xf32>
    %22 = vector.shape_cast %21 : vector<8xf32> to vector<8x1xf32>
    %23 = tpu.reciprocal %22 : vector<8x1xf32> -> vector<8x1xf32>
    %24 = vector.broadcast %23 : vector<8x1xf32> to vector<8x8xf32>
    %25 = arith.mulf %20, %24 : vector<8x8xf32>
    %cst_10 = arith.constant dense<0.000000e+00> : vector<8x8xf32>
    %26 = tpu.matmul %25, %12, %cst_10 {dimension_numbers = #tpu.dot_dimension_numbers<[1], [0], [0], [1], [0, 0, 1, 1], [], []>} : vector<8x8xf32>, vector<8x8xf32>, vector<8x8xf32> -> vector<8x8xf32>
    %27 = vector.extract_strided_slice %7 {offsets = [0, 8], sizes = [8, 8], strides = [1, 1]} : vector<8x32xf32> to vector<8x8xf32>
    %28 = vector.extract_strided_slice %8 {offsets = [0, 8], sizes = [8, 8], strides = [1, 1]} : vector<8x32xf32> to vector<8x8xf32>
    %29 = vector.extract_strided_slice %9 {offsets = [0, 8], sizes = [8, 8], strides = [1, 1]} : vector<8x32xf32> to vector<8x8xf32>
    %cst_11 = arith.constant dense<0.000000e+00> : vector<8x8xf32>
    %30 = tpu.matmul %27, %28, %cst_11 {dimension_numbers = #tpu.dot_dimension_numbers<[1], [1], [0], [0], [0, 0, 1, 0], [], []>} : vector<8x8xf32>, vector<8x8xf32>, vector<8x8xf32> -> vector<8x8xf32>
    %cst_12 = arith.constant 0.353553385 : f32
    %31 = vector.broadcast %cst_12 : f32 to vector<8x8xf32>
    %32 = arith.mulf %30, %31 : vector<8x8xf32>
    %cst_13 = arith.constant dense<0xFF800000> : vector<8xf32>
    %33 = vector.multi_reduction <maximumf>, %32, %cst_13 [1] : vector<8x8xf32> to vector<8xf32>
    %34 = vector.shape_cast %33 : vector<8xf32> to vector<8x1xf32>
    %35 = vector.broadcast %34 : vector<8x1xf32> to vector<8x8xf32>
    %36 = arith.subf %32, %35 : vector<8x8xf32>
    %37 = math.exp %36 : vector<8x8xf32>
    %cst_14 = arith.constant dense<0.000000e+00> : vector<8xf32>
    %38 = vector.multi_reduction <add>, %37, %cst_14 [1] : vector<8x8xf32> to vector<8xf32>
    %39 = vector.shape_cast %38 : vector<8xf32> to vector<8x1xf32>
    %40 = tpu.reciprocal %39 : vector<8x1xf32> -> vector<8x1xf32>
    %41 = vector.broadcast %40 : vector<8x1xf32> to vector<8x8xf32>
    %42 = arith.mulf %37, %41 : vector<8x8xf32>
    %cst_15 = arith.constant dense<0.000000e+00> : vector<8x8xf32>
    %43 = tpu.matmul %42, %29, %cst_15 {dimension_numbers = #tpu.dot_dimension_numbers<[1], [0], [0], [1], [0, 0, 1, 1], [], []>} : vector<8x8xf32>, vector<8x8xf32>, vector<8x8xf32> -> vector<8x8xf32>
    %44 = vector.extract_strided_slice %7 {offsets = [0, 16], sizes = [8, 8], strides = [1, 1]} : vector<8x32xf32> to vector<8x8xf32>
    %45 = vector.extract_strided_slice %8 {offsets = [0, 16], sizes = [8, 8], strides = [1, 1]} : vector<8x32xf32> to vector<8x8xf32>
    %46 = vector.extract_strided_slice %9 {offsets = [0, 16], sizes = [8, 8], strides = [1, 1]} : vector<8x32xf32> to vector<8x8xf32>
    %cst_16 = arith.constant dense<0.000000e+00> : vector<8x8xf32>
    %47 = tpu.matmul %44, %45, %cst_16 {dimension_numbers = #tpu.dot_dimension_numbers<[1], [1], [0], [0], [0, 0, 1, 0], [], []>} : vector<8x8xf32>, vector<8x8xf32>, vector<8x8xf32> -> vector<8x8xf32>
    %cst_17 = arith.constant 0.353553385 : f32
    %48 = vector.broadcast %cst_17 : f32 to vector<8x8xf32>
    %49 = arith.mulf %47, %48 : vector<8x8xf32>
    %cst_18 = arith.constant dense<0xFF800000> : vector<8xf32>
    %50 = vector.multi_reduction <maximumf>, %49, %cst_18 [1] : vector<8x8xf32> to vector<8xf32>
    %51 = vector.shape_cast %50 : vector<8xf32> to vector<8x1xf32>
    %52 = vector.broadcast %51 : vector<8x1xf32> to vector<8x8xf32>
    %53 = arith.subf %49, %52 : vector<8x8xf32>
    %54 = math.exp %53 : vector<8x8xf32>
    %cst_19 = arith.constant dense<0.000000e+00> : vector<8xf32>
    %55 = vector.multi_reduction <add>, %54, %cst_19 [1] : vector<8x8xf32> to vector<8xf32>
    %56 = vector.shape_cast %55 : vector<8xf32> to vector<8x1xf32>
    %57 = tpu.reciprocal %56 : vector<8x1xf32> -> vector<8x1xf32>
    %58 = vector.broadcast %57 : vector<8x1xf32> to vector<8x8xf32>
    %59 = arith.mulf %54, %58 : vector<8x8xf32>
    %cst_20 = arith.constant dense<0.000000e+00> : vector<8x8xf32>
    %60 = tpu.matmul %59, %46, %cst_20 {dimension_numbers = #tpu.dot_dimension_numbers<[1], [0], [0], [1], [0, 0, 1, 1], [], []>} : vector<8x8xf32>, vector<8x8xf32>, vector<8x8xf32> -> vector<8x8xf32>
    %61 = vector.extract_strided_slice %7 {offsets = [0, 24], sizes = [8, 8], strides = [1, 1]} : vector<8x32xf32> to vector<8x8xf32>
    %62 = vector.extract_strided_slice %8 {offsets = [0, 24], sizes = [8, 8], strides = [1, 1]} : vector<8x32xf32> to vector<8x8xf32>
    %63 = vector.extract_strided_slice %9 {offsets = [0, 24], sizes = [8, 8], strides = [1, 1]} : vector<8x32xf32> to vector<8x8xf32>
    %cst_21 = arith.constant dense<0.000000e+00> : vector<8x8xf32>
    %64 = tpu.matmul %61, %62, %cst_21 {dimension_numbers = #tpu.dot_dimension_numbers<[1], [1], [0], [0], [0, 0, 1, 0], [], []>} : vector<8x8xf32>, vector<8x8xf32>, vector<8x8xf32> -> vector<8x8xf32>
    %cst_22 = arith.constant 0.353553385 : f32
    %65 = vector.broadcast %cst_22 : f32 to vector<8x8xf32>
    %66 = arith.mulf %64, %65 : vector<8x8xf32>
    %cst_23 = arith.constant dense<0xFF800000> : vector<8xf32>
    %67 = vector.multi_reduction <maximumf>, %66, %cst_23 [1] : vector<8x8xf32> to vector<8xf32>
    %68 = vector.shape_cast %67 : vector<8xf32> to vector<8x1xf32>
    %69 = vector.broadcast %68 : vector<8x1xf32> to vector<8x8xf32>
    %70 = arith.subf %66, %69 : vector<8x8xf32>
    %71 = math.exp %70 : vector<8x8xf32>
    %cst_24 = arith.constant dense<0.000000e+00> : vector<8xf32>
    %72 = vector.multi_reduction <add>, %71, %cst_24 [1] : vector<8x8xf32> to vector<8xf32>
    %73 = vector.shape_cast %72 : vector<8xf32> to vector<8x1xf32>
    %74 = tpu.reciprocal %73 : vector<8x1xf32> -> vector<8x1xf32>
    %75 = vector.broadcast %74 : vector<8x1xf32> to vector<8x8xf32>
    %76 = arith.mulf %71, %75 : vector<8x8xf32>
    %cst_25 = arith.constant dense<0.000000e+00> : vector<8x8xf32>
    %77 = tpu.matmul %76, %63, %cst_25 {dimension_numbers = #tpu.dot_dimension_numbers<[1], [0], [0], [1], [0, 0, 1, 1], [], []>} : vector<8x8xf32>, vector<8x8xf32>, vector<8x8xf32> -> vector<8x8xf32>
    %78 = tpu.concatenate %26, %43, %60, %77 in 1 : vector<8x8xf32>, vector<8x8xf32>, vector<8x8xf32>, vector<8x8xf32> -> vector<8x32xf32>
    %c0_26 = arith.constant 0 : index
    %c0_27 = arith.constant 0 : index
    %c0_28 = arith.constant 0 : index
    %79 = vector.load %arg4[%c0_26, %c0_27, %c0_28] : memref<1x8x32xf32, #tpu.memory_space<vmem>>, vector<1x8x32xf32>
    %80 = vector.shape_cast %79 : vector<1x8x32xf32> to vector<8x32xf32>
    %81 = vector.shape_cast %78 : vector<8x32xf32> to vector<1x8x32xf32>
    tpu.vector_store %arg4[%c0_26, %c0_27, %c0_28], %81 {strides = array<i32>} : memref<1x8x32xf32, #tpu.memory_space<vmem>>, vector<1x8x32xf32>,
    return
  }
  func.func @transform_0(%arg0: i32) -> (i32, i32, i32) {
    %c0_i32 = arith.constant 0 : i32
    %c0_i32_0 = arith.constant 0 : i32
    %c0_i32_1 = arith.constant 0 : i32
    return %arg0, %c0_i32, %c0_i32_0 : i32, i32, i32
  }
  func.func @transform_1(%arg0: i32) -> (i32, i32) {
    %c0_i32 = arith.constant 0 : i32
    %c0_i32_0 = arith.constant 0 : i32
    %c0_i32_1 = arith.constant 0 : i32
    return %c0_i32, %c0_i32_0 : i32, i32
  }
  func.func @transform_2(%arg0: i32) -> (i32, i32) {
    %c0_i32 = arith.constant 0 : i32
    %c0_i32_0 = arith.constant 0 : i32
    %c0_i32_1 = arith.constant 0 : i32
    return %c0_i32, %c0_i32_0 : i32, i32
  }
  func.func @transform_3(%arg0: i32) -> (i32, i32, i32) {
    %c0_i32 = arith.constant 0 : i32
    %c0_i32_0 = arith.constant 0 : i32
    %c0_i32_1 = arith.constant 0 : i32
    return %arg0, %c0_i32, %c0_i32_0 : i32, i32, i32
  }
}

</mosaic_0001>

<llo_original>
// kernel: tpu_custom_call.1
$region0: #{tpu_custom_call.1}
  #allocation0 [shape = 'u32[]', space=smem, size = 0x4, offset = 0x4, fixed_abs, tag = 'smem constant byte address 0x4 - core index']
  #allocation1 [shape = 'u32[72,128]{1,0:T(1,128)}', space=vmem, size = 0x9000, scoped, tag = 'internal scratch']
  %s0 = inlined_call_operand.hbm [shape: f32[2,8,32], index: 0, kind: input, shape index: {}]
  %s1 = inlined_call_operand.hbm [shape: f32[32,96], index: 1, kind: input, shape index: {}]
  %s2 = inlined_call_operand.vmem [shape: f32[1,96], index: 2, kind: input, shape index: {}]
  %s3 = inlined_call_operand.hbm [shape: f32[2,8,32], index: 3, kind: output, shape index: {}]
  %s4 = sld [smem:[#allocation0]]
  $region53: #{tpu_custom_call.1} parent=0
    _
  %s6 = ssub.s32 1, %s4
  %s7 = scalar_select 0, %s6, %s4
  $region1: #{tpu_custom_call.1} parent=0
    #allocation2 [shape = 'u8[8192]{0}', space=vmem, size = 0x2000, scoped, tag = 'input window, operand 0']
    #allocation3 [shape = 's32[2]{0}', space=sflag, size = 0x8, scoped, tag = 'scoped memory for tpu_custom_call.1']
    #allocation4 [shape = 's32[2]{0}', space=sflag, size = 0x8, scoped, tag = 'scoped memory for tpu_custom_call.1']
    #allocation5 [shape = 'u8[16384]{0}', space=vmem, size = 0x4000, scoped, tag = 'input window, operand 1, single buffered']
    #allocation6 [shape = 's32[1]{0}', space=sflag, size = 0x4, scoped, tag = 'scoped memory for tpu_custom_call.1']
    #allocation7 [shape = 'u8[8192]{0}', space=vmem, size = 0x2000, scoped, tag = 'output window, operand 0']
    %8 = vsyncpa [#allocation3], 0
    %s9 = scalar_lea.sflag [#allocation3], 1
    %10 = vsyncpa %s9, 0
    %11 = vsyncpa [#allocation6], 0
    %12 = vsyncpa [#allocation4], 0
    %s13 = scalar_lea.sflag [#allocation4], 1
    %14 = vsyncpa %s13, 0
    loop: start=0, step=1, limit=4
    $region2: #{tpu_custom_call.1} parent=1 // loop_pre_header
      _
    $region3: #{tpu_custom_call.1} parent=1 // loop_header
      %s16 = sphi 0, %s20
      %p17 = scmp.ge.s32.totalorder %s16, 4
      %s26 = sphi 0, %s28
      %s29 = sphi 0, %s26
      %s30 = sphi 0, %s29
      %s46 = sphi 0, %s30
      %s50 = sphi 0, %s50
      %s52 = sphi 0, %s50
      %s53 = sphi 0, %s52
      %s67 = sphi 0, %s53
      %s71 = sphi 0, %s71
      %s73 = sphi 0, %s71
      %s74 = sphi 0, %s73
      %s88 = sphi 0, %s74
      %s94 = sphi 0, %s96
      %s97 = sphi 0, %s94
      %s98 = sphi 0, %s97
      %s114 = sphi 0, %s98
    $region4: #{tpu_custom_call.1} parent=1 // loop_header_branch
      %19 = sbr.rel (%p17) target = $region8
    $region5: #{tpu_custom_call.1} parent=1 // loop_body
      %s21 = ssub.s32 %s16, 1
      %s22 = ssub.s32 %s16, 2
      %s23 = sadd.s32 %s16, 1
      %s24 = ssub.s32 %s16, %s23
      %p25 = scmp.eq.s32.totalorder %s24, 0
      %s27 = sadd.s32 %s26, 1
      %s28 = scalar_select %p25, %s26, %s27
      %p31 = pneg %p25
      %p32 = scmp.eq.s32.totalorder %s16, 1
      %p33 = por %p31, %p32
      %p34 = scmp.ne.s32.totalorder %s26, %s29
      %p35 = scmp.eq.s32.totalorder %s16, 0
      %p36 = por %p34, %p35
      %p37 = scmp.ne.s32.totalorder %s26, %s29
      %p38 = scmp.eq.s32.totalorder %s21, 1
      %p39 = por %p37, %p38
      %p40 = scmp.ne.s32.totalorder %s29, %s30
      %p41 = scmp.eq.s32.totalorder %s21, 0
      %p42 = por %p40, %p41
      %p43 = scmp.ne.s32.totalorder %s29, %s30
      %p44 = scmp.eq.s32.totalorder %s22, 1
      %p45 = por %p43, %p44
      %p47 = scmp.ne.s32.totalorder %s30, %s46
      %p48 = scmp.eq.s32.totalorder %s22, 0
      %p49 = por %p47, %p48
      %s51 = sadd.s32 %s50, 1
      %p54 = scmp.eq.s32.totalorder %s16, 1
      %p55 = scmp.ne.s32.totalorder %s50, %s52
      %p56 = scmp.eq.s32.totalorder %s16, 0
      %p57 = por %p55, %p56
      %p58 = scmp.ne.s32.totalorder %s50, %s52
      %p59 = scmp.eq.s32.totalorder %s21, 1
      %p60 = por %p58, %p59
      %p61 = scmp.ne.s32.totalorder %s52, %s53
      %p62 = scmp.eq.s32.totalorder %s21, 0
      %p63 = por %p61, %p62
      %p64 = scmp.ne.s32.totalorder %s52, %s53
      %p65 = scmp.eq.s32.totalorder %s22, 1
      %p66 = por %p64, %p65
      %p68 = scmp.ne.s32.totalorder %s53, %s67
      %p69 = scmp.eq.s32.totalorder %s22, 0
      %p70 = por %p68, %p69
      %s72 = sadd.s32 %s71, 1
      %p75 = scmp.eq.s32.totalorder %s16, 1
      %p76 = scmp.ne.s32.totalorder %s71, %s73
      %p77 = scmp.eq.s32.totalorder %s16, 0
      %p78 = por %p76, %p77
      %p79 = scmp.ne.s32.totalorder %s71, %s73
      %p80 = scmp.eq.s32.totalorder %s21, 1
      %p81 = por %p79, %p80
      %p82 = scmp.ne.s32.totalorder %s73, %s74
      %p83 = scmp.eq.s32.totalorder %s21, 0
      %p84 = por %p82, %p83
      %p85 = scmp.ne.s32.totalorder %s73, %s74
      %p86 = scmp.eq.s32.totalorder %s22, 1
      %p87 = por %p85, %p86
      %p89 = scmp.ne.s32.totalorder %s74, %s88
      %p90 = scmp.eq.s32.totalorder %s22, 0
      %p91 = por %p89, %p90
      %s92 = ssub.s32 %s16, %s23
      %p93 = scmp.eq.s32.totalorder %s92, 0
      %s95 = sadd.s32 %s94, 1
      %s96 = scalar_select %p93, %s94, %s95
      %p99 = pneg %p93
      %p100 = scmp.eq.s32.totalorder %s16, 1
      %p101 = por %p99, %p100
      %p102 = scmp.ne.s32.totalorder %s94, %s97
      %p103 = scmp.eq.s32.totalorder %s16, 0
      %p104 = por %p102, %p103
      %p105 = scmp.ne.s32.totalorder %s94, %s97
      %p106 = scmp.eq.s32.totalorder %s21, 1
      %p107 = por %p105, %p106
      %p108 = scmp.ne.s32.totalorder %s97, %s98
      %p109 = scmp.eq.s32.totalorder %s21, 0
      %p110 = por %p108, %p109
      %p111 = scmp.ne.s32.totalorder %s97, %s98
      %p112 = scmp.eq.s32.totalorder %s22, 1
      %p113 = por %p111, %p112
      %p115 = scmp.ne.s32.totalorder %s98, %s114
      %p116 = scmp.eq.s32.totalorder %s22, 0
      %p117 = por %p115, %p116
      %p118 = scmp.le.s32.totalorder 1, %s16
      %p119 = scmp.lt.s32.totalorder %s16, 3
      %p120 = pnand %p118, %p119
      %p121 = pneg %p120
      // Predicated region
      $region9: #{tpu_custom_call.1} parent=5 // pred_check
        _
      $region10: #{tpu_custom_call.1} parent=5 // pred_check_branch
        %123 = sbr.rel (%p120) target = $region12
      $region11: #{tpu_custom_call.1} parent=5 // pred_region
        %s124 = ssub.s32 %s16, 1
        // Predicated region
        $region13: #{tpu_custom_call.1} parent=11 // pred_check
          %p125 = pneg %p63
        $region14: #{tpu_custom_call.1} parent=11 // pred_check_branch
          %127 = sbr.rel (%p125) target = $region16
        $region15: #{tpu_custom_call.1} parent=11 // pred_region
          %129 = vsyncadd [#allocation6], 0
          %s130 = sshll.u32 %s1, 4
          %s131 = int_to_ptr.hbm [resolvable:$true] %s130
          %s132 = sshll.u32 [#allocation5], 4
          %s133 = int_to_ptr.vmem [resolvable:$true] %s132
          %138 = dma.hbm_to_vmem [thread:$0]  %s131, 512, %s133, [#allocation6], 128, 128, 8
        $region16: #{tpu_custom_call.1} parent=11 // pred_fallthru
          _
        // Predicated region
        $region17: #{tpu_custom_call.1} parent=11 // pred_check
          %p139 = pneg %p84
        $region18: #{tpu_custom_call.1} parent=11 // pred_check_branch
          %141 = sbr.rel (%p139) target = $region20
        $region19: #{tpu_custom_call.1} parent=11 // pred_region
          _
        $region20: #{tpu_custom_call.1} parent=11 // pred_fallthru
          _
      $region12: #{tpu_custom_call.1} parent=5 // pred_fallthru
        _
      %p142 = scmp.lt.s32.totalorder %s16, 2
      // Predicated region
      $region21: #{tpu_custom_call.1} parent=5 // pred_check
        %p143 = pneg %p142
      $region22: #{tpu_custom_call.1} parent=5 // pred_check_branch
        %145 = sbr.rel (%p143) target = $region24
      $region23: #{tpu_custom_call.1} parent=5 // pred_region
        // Predicated region
        $region25: #{tpu_custom_call.1} parent=23 // pred_check
          %p146 = pneg %p36
        $region26: #{tpu_custom_call.1} parent=23 // pred_check_branch
          %148 = sbr.rel (%p146) target = $region28
        $region27: #{tpu_custom_call.1} parent=23 // pred_region
          %s149 = sand.u32 %s26, 1
          %s150 = scalar_lea.sflag [#allocation3], %s149
          %s151 = sand.u32 %s26, 1
          %s152 = smul.addr %s151, 8
          %s153 = scalar_lea.vmem [#allocation2], %s152
          %155 = vsyncadd %s150, 0
          %s156 = smul.addr %s16, 8
          %s157 = scalar_lea.hbm %s0, %s156
          %s159 = sshll.u32 %s157, 4
          %s160 = int_to_ptr.hbm [resolvable:$true] %s159
          %s161 = sshll.u32 %s153, 4
          %s162 = int_to_ptr.vmem [resolvable:$true] %s161
          %164 = dma.hbm_to_vmem [thread:$0]  %s160, 128, %s162, %s150
        $region28: #{tpu_custom_call.1} parent=23 // pred_fallthru
          _
      $region24: #{tpu_custom_call.1} parent=5 // pred_fallthru
        _
      %p165 = scmp.le.s32.totalorder 1, %s16
      %p166 = scmp.lt.s32.totalorder %s16, 3
      %p167 = pnand %p165, %p166
      %p168 = pneg %p167
      // Predicated region
      $region29: #{tpu_custom_call.1} parent=5 // pred_check
        _
      $region30: #{tpu_custom_call.1} parent=5 // pred_check_branch
        %170 = sbr.rel (%p167) target = $region32
      $region31: #{tpu_custom_call.1} parent=5 // pred_region
        %s171 = ssub.s32 %s16, 1
        %s172 = sand.u32 %s29, 1
        %s173 = scalar_lea.sflag [#allocation3], %s172
        %s174 = sand.u32 %s29, 1
        %s175 = smul.addr %s174, 8
        %s176 = scalar_lea.vmem [#allocation2], %s175
        // Predicated region
        $region33: #{tpu_custom_call.1} parent=31 // pred_check
          %p177 = pneg %p42
        $region34: #{tpu_custom_call.1} parent=31 // pred_check_branch
          %179 = sbr.rel (%p177) target = $region36
        $region35: #{tpu_custom_call.1} parent=31 // pred_region
          %181 = dma.done %s173, 128
        $region36: #{tpu_custom_call.1} parent=31 // pred_fallthru
          _
        // Predicated region
        $region37: #{tpu_custom_call.1} parent=31 // pred_check
          %p182 = pneg %p63
        $region38: #{tpu_custom_call.1} parent=31 // pred_check_branch
          %184 = sbr.rel (%p182) target = $region40
        $region39: #{tpu_custom_call.1} parent=31 // pred_region
          %186 = dma.done [#allocation6], 512
        $region40: #{tpu_custom_call.1} parent=31 // pred_fallthru
          _
        %s187 = sand.u32 %s29, 1
        %s188 = scalar_lea.sflag [#allocation3], %s187
        %s189 = sand.u32 %s29, 1
        %s190 = smul.addr %s189, 8
        %s191 = scalar_lea.vmem [#allocation2], %s190
        %p192 = pneg %p42
        %p193 = pneg %p39
        %p194 = pneg %p63
        %p195 = pneg %p60
        %p196 = pneg %p84
        %p197 = pneg %p81
        %p198 = pneg %p110
        %p199 = pneg %p107
        %s200 = sand.u32 %s97, 1
        %s201 = scalar_lea.sflag [#allocation4], %s200
        %s202 = sand.u32 %s97, 1
        %s203 = smul.addr %s202, 8
        %s204 = scalar_lea.vmem [#allocation7], %s203
        %v205 = vld [vmem:[%s176] sm:$0xff]
        %v206 = vld [vmem:[#allocation5] sm:$0xff]
        %v207 = vld [vmem:[#allocation5 + $0x8] sm:$0xff]
        %v208 = vld [vmem:[#allocation5 + $0x10] sm:$0xff]
        %v209 = vld [vmem:[#allocation5 + $0x18] sm:$0xff]
        %v210 = vld [vmem:[%s2] sm:$0x1]
        %v212 = vperm.slane %v210, 0
        %vm214 = vcmask 261120
        %v216 = vsel %vm214, %v205, 0
        %218 = vmatpush.msra.mxu0 0.0
        %219 = vmatpush.msra.mxu0 0.0
        %220 = vmatpush.msra.mxu0 0.0
        %221 = vmatpush.msra.mxu0 0.0
        %222 = vmatpush.msra.mxu0 0.0
        %223 = vmatpush.msra.mxu0 0.0
        %224 = vmatpush.msra.mxu0 0.0
        %225 = vmatpush.msra.mxu0 0.0
        %226 = vmatpush.msra.mxu0 0.0
        %227 = vmatpush.msra.mxu0 0.0
        %228 = vmatpush.msra.mxu0 0.0
        %229 = vmatpush.msra.mxu0 0.0
        %230 = vmatpush.msra.mxu0 %v209
        %231 = vmatpush.msra.mxu0 %v208
        %232 = vmatpush.msra.mxu0 %v207
        %233 = vmatpush.msra.mxu0 %v206
        %234 = vmatmul.f32.gmra.mxu0 %v216
        %v235 = vpop.f32.mrf.mxu0
        %v236 = vadd.f32 %v212, %v235
        %237 = vdwg.mxu0
        %239 = vrot.lane.b32.xlu0 %v236, 96
        %v240 = vpop.permute.xlu0 %239
        %vm241 = vcmask 64512
        %v242 = vsel %vm241, %v236, 0
        %v244 = vsel %vm241, %v240, 0
        %246 = vmatpush.xpose.msra.mxu0 0.0
        %247 = vmatpush.xpose.msra.mxu0 0.0
        %248 = vmatpush.xpose.msra.mxu0 0.0
        %249 = vmatpush.xpose.msra.mxu0 0.0
        %250 = vmatpush.xpose.msra.mxu0 0.0
        %251 = vmatpush.xpose.msra.mxu0 0.0
        %252 = vmatpush.xpose.msra.mxu0 0.0
        %253 = vmatpush.xpose.msra.mxu0 0.0
        %254 = vmatpush.xpose.msra.mxu0 0.0
        %255 = vmatpush.xpose.msra.mxu0 0.0
        %256 = vmatpush.xpose.msra.mxu0 0.0
        %257 = vmatpush.xpose.msra.mxu0 0.0
        %258 = vmatpush.xpose.msra.mxu0 0.0
        %259 = vmatpush.xpose.msra.mxu0 0.0
        %260 = vmatpush.xpose.msra.mxu0 0.0
        %261 = vmatpush.xpose.msra.mxu0 %v244
        %262 = vmatmul.f32.gmra.mxu0 %v242
        %v263 = vpop.f32.mrf.mxu0
        %v264 = vadd.f32 0.0, %v263
        %265 = vdwg.mxu0
        %v266 = vmul.f32 %v264, 0.35355338
        %v267 = vsel %vm241, %v266, -inf
        %268 = vmax.xlane.f32.xlu0 %v267
        %v269 = vpop.xlane.xlu0 %268
        %v270 = vsub.f32 %v266, %v269
        %v271 = vmul.f32 %v270, 1.442695
        %v272 = vpow.pop %v271
        %v273 = vsel %vm241, %v272, 0.0
        %274 = vadd.xlane.f32.xlu0 %v273
        %v275 = vpop.xlane.xlu0 %274
        %v276 = vrcp.pop %v275
        %v277 = vmul.f32 %v275, %v276
        %v278 = vsub.f32 1.0, %v277
        %v279 = vmul.f32 %v276, %v278
        %v280 = vadd.f32 %v276, %v279
        %vm281 = vweird.f32 %v275
        %vm282 = vweird.f32 %v276
        %vm283 = vmor %vm281, %vm282
        %v284 = vsel %vm283, %v276, %v280
        %v285 = vand.u32 2147483647, %v275
        %vm286 = vcmp.eq.f32.partialorder %v285, 8.507059e+37
        %v287 = vand.u32 %v275, 2147483648
        %v288 = vor.u32 1.1754944e-38, %v287
        %v289 = vsel %vm286, %v288, %v284
        %v290 = vmul.f32 %v272, %v289
        %291 = vrot.lane.b32.xlu0 %v236, 64
        %v292 = vpop.permute.xlu0 %291
        %v295 = vsel %vm241, %v290, 0
        %297 = vmatpush.msra.mxu0 0.0
        %298 = vmatpush.msra.mxu0 0.0
        %299 = vmatpush.msra.mxu0 0.0
        %300 = vmatpush.msra.mxu0 0.0
        %301 = vmatpush.msra.mxu0 0.0
        %302 = vmatpush.msra.mxu0 0.0
        %303 = vmatpush.msra.mxu0 0.0
        %304 = vmatpush.msra.mxu0 0.0
        %305 = vmatpush.msra.mxu0 0.0
        %306 = vmatpush.msra.mxu0 0.0
        %307 = vmatpush.msra.mxu0 0.0
        %308 = vmatpush.msra.mxu0 0.0
        %309 = vmatpush.msra.mxu0 0.0
        %310 = vmatpush.msra.mxu0 0.0
        %311 = vmatpush.msra.mxu0 0.0
        %312 = vmatpush.msra.mxu0 %v292
        %313 = vmatmul.f32.gmra.mxu0 %v295
        %v314 = vpop.f32.mrf.mxu0
        %v315 = vadd.f32 0.0, %v314
        %316 = vdwg.mxu0
        %317 = vrot.lane.b32.xlu0 %v236, 120
        %v318 = vpop.permute.xlu0 %317
        %319 = vrot.lane.b32.xlu0 %v236, 88
        %v320 = vpop.permute.xlu0 %319
        %v321 = vsel %vm241, %v318, 0
        %v323 = vsel %vm241, %v320, 0
        %325 = vmatpush.xpose.msra.mxu0 0.0
        %326 = vmatpush.xpose.msra.mxu0 0.0
        %327 = vmatpush.xpose.msra.mxu0 0.0
        %328 = vmatpush.xpose.msra.mxu0 0.0
        %329 = vmatpush.xpose.msra.mxu0 0.0
        %330 = vmatpush.xpose.msra.mxu0 0.0
        %331 = vmatpush.xpose.msra.mxu0 0.0
        %332 = vmatpush.xpose.msra.mxu0 0.0
        %333 = vmatpush.xpose.msra.mxu0 0.0
        %334 = vmatpush.xpose.msra.mxu0 0.0
        %335 = vmatpush.xpose.msra.mxu0 0.0
        %336 = vmatpush.xpose.msra.mxu0 0.0
        %337 = vmatpush.xpose.msra.mxu0 0.0
        %338 = vmatpush.xpose.msra.mxu0 0.0
        %339 = vmatpush.xpose.msra.mxu0 0.0
        %340 = vmatpush.xpose.msra.mxu0 %v323
        %341 = vmatmul.f32.gmra.mxu0 %v321
        %v342 = vpop.f32.mrf.mxu0
        %v343 = vadd.f32 0.0, %v342
        %344 = vdwg.mxu0
        %v345 = vmul.f32 %v343, 0.35355338
        %v346 = vsel %vm241, %v345, -inf
        %347 = vmax.xlane.f32.xlu0 %v346
        %v348 = vpop.xlane.xlu0 %347
        %v349 = vsub.f32 %v345, %v348
        %v350 = vmul.f32 %v349, 1.442695
        %v351 = vpow.pop %v350
        %v352 = vsel %vm241, %v351, 0.0
        %353 = vadd.xlane.f32.xlu0 %v352
        %v354 = vpop.xlane.xlu0 %353
        %v355 = vrcp.pop %v354
        %v356 = vmul.f32 %v354, %v355
        %v357 = vsub.f32 1.0, %v356
        %v358 = vmul.f32 %v355, %v357
        %v359 = vadd.f32 %v355, %v358
        %vm360 = vweird.f32 %v354
        %vm361 = vweird.f32 %v355
        %vm362 = vmor %vm360, %vm361
        %v363 = vsel %vm362, %v355, %v359
        %v364 = vand.u32 2147483647, %v354
        %vm365 = vcmp.eq.f32.partialorder %v364, 8.507059e+37
        %v366 = vand.u32 %v354, 2147483648
        %v367 = vor.u32 1.1754944e-38, %v366
        %v368 = vsel %vm365, %v367, %v363
        %v369 = vmul.f32 %v351, %v368
        %370 = vrot.lane.b32.xlu0 %v236, 56
        %v371 = vpop.permute.xlu0 %370
        %v374 = vsel %vm241, %v369, 0
        %376 = vmatpush.msra.mxu0 0.0
        %377 = vmatpush.msra.mxu0 0.0
        %378 = vmatpush.msra.mxu0 0.0
        %379 = vmatpush.msra.mxu0 0.0
        %380 = vmatpush.msra.mxu0 0.0
        %381 = vmatpush.msra.mxu0 0.0
        %382 = vmatpush.msra.mxu0 0.0
        %383 = vmatpush.msra.mxu0 0.0
        %384 = vmatpush.msra.mxu0 0.0
        %385 = vmatpush.msra.mxu0 0.0
        %386 = vmatpush.msra.mxu0 0.0
        %387 = vmatpush.msra.mxu0 0.0
        %388 = vmatpush.msra.mxu0 0.0
        %389 = vmatpush.msra.mxu0 0.0
        %390 = vmatpush.msra.mxu0 0.0
        %391 = vmatpush.msra.mxu0 %v371
        %392 = vmatmul.f32.gmra.mxu0 %v374
        %v393 = vpop.f32.mrf.mxu0
        %v394 = vadd.f32 0.0, %v393
        %395 = vdwg.mxu0
        %396 = vrot.lane.b32.xlu0 %v236, 112
        %v397 = vpop.permute.xlu0 %396
        %398 = vrot.lane.b32.xlu0 %v236, 80
        %v399 = vpop.permute.xlu0 %398
        %v400 = vsel %vm241, %v397, 0
        %v402 = vsel %vm241, %v399, 0
        %404 = vmatpush.xpose.msra.mxu0 0.0
        %405 = vmatpush.xpose.msra.mxu0 0.0
        %406 = vmatpush.xpose.msra.mxu0 0.0
        %407 = vmatpush.xpose.msra.mxu0 0.0
        %408 = vmatpush.xpose.msra.mxu0 0.0
        %409 = vmatpush.xpose.msra.mxu0 0.0
        %410 = vmatpush.xpose.msra.mxu0 0.0
        %411 = vmatpush.xpose.msra.mxu0 0.0
        %412 = vmatpush.xpose.msra.mxu0 0.0
        %413 = vmatpush.xpose.msra.mxu0 0.0
        %414 = vmatpush.xpose.msra.mxu0 0.0
        %415 = vmatpush.xpose.msra.mxu0 0.0
        %416 = vmatpush.xpose.msra.mxu0 0.0
        %417 = vmatpush.xpose.msra.mxu0 0.0
        %418 = vmatpush.xpose.msra.mxu0 0.0
        %419 = vmatpush.xpose.msra.mxu0 %v402
        %420 = vmatmul.f32.gmra.mxu0 %v400
        %v421 = vpop.f32.mrf.mxu0
        %v422 = vadd.f32 0.0, %v421
        %423 = vdwg.mxu0
        %v424 = vmul.f32 %v422, 0.35355338
        %v425 = vsel %vm241, %v424, -inf
        %426 = vmax.xlane.f32.xlu0 %v425
        %v427 = vpop.xlane.xlu0 %426
        %v428 = vsub.f32 %v424, %v427
        %v429 = vmul.f32 %v428, 1.442695
        %v430 = vpow.pop %v429
        %v431 = vsel %vm241, %v430, 0.0
        %432 = vadd.xlane.f32.xlu0 %v431
        %v433 = vpop.xlane.xlu0 %432
        %v434 = vrcp.pop %v433
        %v435 = vmul.f32 %v433, %v434
        %v436 = vsub.f32 1.0, %v435
        %v437 = vmul.f32 %v434, %v436
        %v438 = vadd.f32 %v434, %v437
        %vm439 = vweird.f32 %v433
        %vm440 = vweird.f32 %v434
        %vm441 = vmor %vm439, %vm440
        %v442 = vsel %vm441, %v434, %v438
        %v443 = vand.u32 2147483647, %v433
        %vm444 = vcmp.eq.f32.partialorder %v443, 8.507059e+37
        %v445 = vand.u32 %v433, 2147483648
        %v446 = vor.u32 1.1754944e-38, %v445
        %v447 = vsel %vm444, %v446, %v442
        %v448 = vmul.f32 %v430, %v447
        %449 = vrot.lane.b32.xlu0 %v236, 48
        %v450 = vpop.permute.xlu0 %449
        %v453 = vsel %vm241, %v448, 0
        %455 = vmatpush.msra.mxu0 0.0
        %456 = vmatpush.msra.mxu0 0.0
        %457 = vmatpush.msra.mxu0 0.0
        %458 = vmatpush.msra.mxu0 0.0
        %459 = vmatpush.msra.mxu0 0.0
        %460 = vmatpush.msra.mxu0 0.0
        %461 = vmatpush.msra.mxu0 0.0
        %462 = vmatpush.msra.mxu0 0.0
        %463 = vmatpush.msra.mxu0 0.0
        %464 = vmatpush.msra.mxu0 0.0
        %465 = vmatpush.msra.mxu0 0.0
        %466 = vmatpush.msra.mxu0 0.0
        %467 = vmatpush.msra.mxu0 0.0
        %468 = vmatpush.msra.mxu0 0.0
        %469 = vmatpush.msra.mxu0 0.0
        %470 = vmatpush.msra.mxu0 %v450
        %471 = vmatmul.f32.gmra.mxu0 %v453
        %v472 = vpop.f32.mrf.mxu0
        %v473 = vadd.f32 0.0, %v472
        %474 = vdwg.mxu0
        %475 = vrot.lane.b32.xlu0 %v236, 104
        %v476 = vpop.permute.xlu0 %475
        %477 = vrot.lane.b32.xlu0 %v236, 72
        %v478 = vpop.permute.xlu0 %477
        %v479 = vsel %vm241, %v476, 0
        %v481 = vsel %vm241, %v478, 0
        %483 = vmatpush.xpose.msra.mxu0 0.0
        %484 = vmatpush.xpose.msra.mxu0 0.0
        %485 = vmatpush.xpose.msra.mxu0 0.0
        %486 = vmatpush.xpose.msra.mxu0 0.0
        %487 = vmatpush.xpose.msra.mxu0 0.0
        %488 = vmatpush.xpose.msra.mxu0 0.0
        %489 = vmatpush.xpose.msra.mxu0 0.0
        %490 = vmatpush.xpose.msra.mxu0 0.0
        %491 = vmatpush.xpose.msra.mxu0 0.0
        %492 = vmatpush.xpose.msra.mxu0 0.0
        %493 = vmatpush.xpose.msra.mxu0 0.0
        %494 = vmatpush.xpose.msra.mxu0 0.0
        %495 = vmatpush.xpose.msra.mxu0 0.0
        %496 = vmatpush.xpose.msra.mxu0 0.0
        %497 = vmatpush.xpose.msra.mxu0 0.0
        %498 = vmatpush.xpose.msra.mxu0 %v481
        %499 = vmatmul.f32.gmra.mxu0 %v479
        %v500 = vpop.f32.mrf.mxu0
        %v501 = vadd.f32 0.0, %v500
        %502 = vdwg.mxu0
        %v503 = vmul.f32 %v501, 0.35355338
        %v504 = vsel %vm241, %v503, -inf
        %505 = vmax.xlane.f32.xlu0 %v504
        %v506 = vpop.xlane.xlu0 %505
        %v507 = vsub.f32 %v503, %v506
        %v508 = vmul.f32 %v507, 1.442695
        %v509 = vpow.pop %v508
        %v510 = vsel %vm241, %v509, 0.0
        %511 = vadd.xlane.f32.xlu0 %v510
        %v512 = vpop.xlane.xlu0 %511
        %v513 = vrcp.pop %v512
        %v514 = vmul.f32 %v512, %v513
        %v515 = vsub.f32 1.0, %v514
        %v516 = vmul.f32 %v513, %v515
        %v517 = vadd.f32 %v513, %v516
        %vm518 = vweird.f32 %v512
        %vm519 = vweird.f32 %v513
        %vm520 = vmor %vm518, %vm519
        %v521 = vsel %vm520, %v513, %v517
        %v522 = vand.u32 2147483647, %v512
        %vm523 = vcmp.eq.f32.partialorder %v522, 8.507059e+37
        %v524 = vand.u32 %v512, 2147483648
        %v525 = vor.u32 1.1754944e-38, %v524
        %v526 = vsel %vm523, %v525, %v521
        %v527 = vmul.f32 %v509, %v526
        %528 = vrot.lane.b32.xlu0 %v236, 40
        %v529 = vpop.permute.xlu0 %528
        %v532 = vsel %vm241, %v527, 0
        %534 = vmatpush.msra.mxu0 0.0
        %535 = vmatpush.msra.mxu0 0.0
        %536 = vmatpush.msra.mxu0 0.0
        %537 = vmatpush.msra.mxu0 0.0
        %538 = vmatpush.msra.mxu0 0.0
        %539 = vmatpush.msra.mxu0 0.0
        %540 = vmatpush.msra.mxu0 0.0
        %541 = vmatpush.msra.mxu0 0.0
        %542 = vmatpush.msra.mxu0 0.0
        %543 = vmatpush.msra.mxu0 0.0
        %544 = vmatpush.msra.mxu0 0.0
        %545 = vmatpush.msra.mxu0 0.0
        %546 = vmatpush.msra.mxu0 0.0
        %547 = vmatpush.msra.mxu0 0.0
        %548 = vmatpush.msra.mxu0 0.0
        %549 = vmatpush.msra.mxu0 %v529
        %550 = vmatmul.f32.gmra.mxu0 %v532
        %v551 = vpop.f32.mrf.mxu0
        %v552 = vadd.f32 0.0, %v551
        %553 = vdwg.mxu0
        %555 = vrot.lane.b32.xlu0 %v394, 8
        %v556 = vpop.permute.xlu0 %555
        %559 = vrot.lane.b32.xlu0 %v473, 16
        %v560 = vpop.permute.xlu0 %559
        %563 = vrot.lane.b32.xlu0 %v552, 24
        %v564 = vpop.permute.xlu0 %563
        %v566 = vsel %vm241, %v315, %v556
        %vm567 = vcmask 130048
        %v568 = vsel %vm567, %v566, %v560
        %vm569 = vcmask 195584
        %v570 = vsel %vm569, %v568, %v564
        %571 = vst.msk [vmem:[%s204] sm:$0xff] %vm214, %v570
        %s572 = sand.u32 %s97, 1
        %s573 = scalar_lea.sflag [#allocation4], %s572
        %s574 = sand.u32 %s97, 1
        %s575 = smul.addr %s574, 8
        %s576 = scalar_lea.vmem [#allocation7], %s575
        // Predicated region
        $region41: #{tpu_custom_call.1} parent=31 // pred_check
          %p577 = pneg %p107
        $region42: #{tpu_custom_call.1} parent=31 // pred_check_branch
          %579 = sbr.rel (%p577) target = $region44
        $region43: #{tpu_custom_call.1} parent=31 // pred_region
          %581 = vsyncadd %s573, 0
          %s582 = smul.addr %s21, 8
          %s583 = scalar_lea.hbm %s3, %s582
          %s585 = sshll.u32 %s576, 4
          %s586 = int_to_ptr.vmem [resolvable:$true] %s585
          %s587 = sshll.u32 %s583, 4
          %s588 = int_to_ptr.hbm [resolvable:$true] %s587
          %590 = dma.vmem_to_hbm [thread:$0]  %s586, 128, %s588, %s573
        $region44: #{tpu_custom_call.1} parent=31 // pred_fallthru
          _
      $region32: #{tpu_custom_call.1} parent=5 // pred_fallthru
        _
      %p591 = scmp.le.s32.totalorder 2, %s16
      // Predicated region
      $region45: #{tpu_custom_call.1} parent=5 // pred_check
        %p592 = pneg %p591
      $region46: #{tpu_custom_call.1} parent=5 // pred_check_branch
        %594 = sbr.rel (%p592) target = $region48
      $region47: #{tpu_custom_call.1} parent=5 // pred_region
        %s595 = ssub.s32 %s16, 2
        // Predicated region
        $region49: #{tpu_custom_call.1} parent=47 // pred_check
          %p596 = pneg %p113
        $region50: #{tpu_custom_call.1} parent=47 // pred_check_branch
          %598 = sbr.rel (%p596) target = $region52
        $region51: #{tpu_custom_call.1} parent=47 // pred_region
          %s599 = sand.u32 %s98, 1
          %s600 = scalar_lea.sflag [#allocation4], %s599
          %s601 = sand.u32 %s98, 1
          %s602 = smul.addr %s601, 8
          %s603 = scalar_lea.vmem [#allocation7], %s602
          %605 = dma.done %s600, 128
        $region52: #{tpu_custom_call.1} parent=47 // pred_fallthru
          _
      $region48: #{tpu_custom_call.1} parent=5 // pred_fallthru
        _
    $region6: #{tpu_custom_call.1} parent=1 // loop_footer
      %s20 = sadd.s32 1, %s16
    $region7: #{tpu_custom_call.1} parent=1 // loop_footer_branch
      %15 = sbr.rel target = $region3
    $region8: #{tpu_custom_call.1} parent=1 // loop_exit
      _
    %606 = vsyncpa [#allocation3], 1
    %s607 = scalar_lea.sflag [#allocation3], 1
    %608 = vsyncpa %s607, 1
    %609 = vsyncpa [#allocation6], 1
    %610 = vsyncpa [#allocation4], 1
    %s611 = scalar_lea.sflag [#allocation4], 1
    %612 = vsyncpa %s611, 1

</llo_original>
